<compile_context>
chip_gen: v5e
topology: v5e:2x2
jax: 0.10.0
libtpu: 0.0.40
codegen_flags: <defaults>
</compile_context>

<pallas_src>
import jax
import jax.numpy as jnp
from jax.experimental import pallas as pl
from jax.experimental.pallas import tpu as pltpu


def _round_up(x, m):
    return (x + m - 1) // m * m


def _cdiv(a, b):
    return (a + b - 1) // b


def _tpu_generation():
    """Best-effort TPU generation detection from device_kind."""
    try:
        kind = jax.devices()[0].device_kind.lower()
    except Exception:  # pragma: no cover - non-TPU fallback
        return "unknown"
    if "v7" in kind:
        return "v7x"
    if "v6" in kind:
        return "v6e"
    if "v5" in kind:
        return "v5e" if ("lite" in kind or "5e" in kind) else "v5p"
    return "unknown"


def _default_tiling(gen):
    # (tm, tf, tf_align, vmem_limit_bytes)
    if gen in ("v7x", "unknown"):
        # 64 MiB VMEM, 2 TCs sharing HBM: smaller tf, large tm, modest cap.
        return 768, 256, 256, 56 * 1024 * 1024
    if gen == "v5e":
        # 128 MiB VMEM, 128-wide MXU.
        return 1024, 1024, 128, 100 * 1024 * 1024
    # v6e / v5p: 128 MiB VMEM, 256-wide MXU.
    return 1024, 1024, 256, 100 * 1024 * 1024


def ffn_kernel(x_ref, w1_ref, b1_ref, w2_ref, b2_ref, g_ref, beta_ref,
               o_ref, acc_ref):
    f = pl.program_id(1)
    nf = pl.num_programs(1)

    @pl.when(f == 0)
    def _():
        acc_ref[...] = jnp.zeros_like(acc_ref)

    # linear1 (current F-chunk) + ReLU; operands in the weight's native dtype
    # (bf16 fast path when weights are bf16), f32 accumulation.
    x = x_ref[...]
    x_mm = x if x.dtype == w1_ref.dtype else x.astype(w1_ref.dtype)
    h = jnp.dot(x_mm, w1_ref[...], preferred_element_type=jnp.float32)
    h = jnp.maximum(h + b1_ref[...].astype(jnp.float32), 0.0)

    # Partial linear2 contribution of this F-chunk into the f32 accumulator.
    # Keep h in f32 when weights are f32 (matches the f32 torch module).
    h_mm = h if w2_ref.dtype == jnp.float32 else h.astype(w2_ref.dtype)
    acc_ref[...] += jnp.dot(h_mm, w2_ref[...],
                            preferred_element_type=jnp.float32)

    @pl.when(f == nf - 1)
    def _():
        # residual + bias2 + LayerNorm (eps=1e-5, biased variance) in f32.
        r = (x_ref[...].astype(jnp.float32) + acc_ref[...]
             + b2_ref[...].astype(jnp.float32))
        mu = jnp.mean(r, axis=-1, keepdims=True)
        var = jnp.mean((r - mu) * (r - mu), axis=-1, keepdims=True)
        out = (r - mu) * jax.lax.rsqrt(var + 1e-5)
        out = (out * g_ref[...].astype(jnp.float32)
               + beta_ref[...].astype(jnp.float32))
        o_ref[...] = out.astype(o_ref.dtype)


def ffn_layer(x, w1, b1, w2, b2, gamma, beta, *,
              tm=None, tf=None, vmem_limit_bytes=None):
    """x: (S, B, D). Weights stored [in, out] (== torch weight.T). Returns (S, B, D)."""
    S, B, D = x.shape
    F = w1.shape[1]
    N = S * B
    x2 = x.reshape(N, D)

    gen = _tpu_generation()
    tm_d, tf_d, tf_align, vmem_d = _default_tiling(gen)
    tm = tm_d if tm is None else tm
    tf = tf_d if tf is None else tf
    vmem_limit_bytes = vmem_d if vmem_limit_bytes is None else vmem_limit_bytes

    # ---- Row tile: as large as requested, 8-aligned, never larger than N. ----
    tm_eff = _round_up(min(tm, _round_up(N, 8)), 8)
    # v7x has 2 TensorCores: make sure the "parallel" row axis has >= 2 tiles.
    if gen == "v7x" and N > 8 and _cdiv(N, tm_eff) < 2:
        tm_eff = max(8, _round_up(_cdiv(N, 2), 8))
    n_pad = _round_up(N, tm_eff)
    if n_pad != N:
        # TODO(synk): a masked last row tile would avoid this extra HBM pass.
        x2 = jnp.pad(x2, ((0, n_pad - N), (0, 0)))

    # ---- Hidden-dim tile: MXU-aligned (256 on v6e/v7x, 128 on v5e); pad F. ---
    tf_eff = _round_up(max(1, min(tf, F)), tf_align)
    F_pad = _round_up(F, tf_eff)
    nf = F_pad // tf_eff
    if F_pad != F:
        # Zero-padded W1 columns / b1 entries / W2 rows contribute exactly 0
        # through ReLU and the second matmul.
        w1 = jnp.pad(w1, ((0, 0), (0, F_pad - F)))
        b1 = jnp.pad(b1, (0, F_pad - F))
        w2 = jnp.pad(w2, ((0, F_pad - F), (0, 0)))

    # Biases / affine params as (1, dim) rows for implicit lane broadcast.
    b1r = b1.reshape(1, F_pad)
    b2r = b2.reshape(1, D)
    gr = gamma.reshape(1, D)
    br = beta.reshape(1, D)

    # Serpentine F order per row tile: keeps the boundary W1/W2/b1 chunk
    # VMEM-resident across consecutive row tiles (saves one chunk re-DMA).
    def _fser(i, f):
        return f + (i % 2) * (nf - 1 - 2 * f)

    out = pl.pallas_call(
        ffn_kernel,
        out_shape=jax.ShapeDtypeStruct((n_pad, D), x.dtype),
        grid_spec=pltpu.PrefetchScalarGridSpec(
            num_scalar_prefetch=0,
            grid=(n_pad // tm_eff, nf),            # reduction (F) axis last
            in_specs=[
                pl.BlockSpec((tm_eff, D), lambda i, f: (i, 0)),        # x rows
                pl.BlockSpec((D, tf_eff), lambda i, f: (0, _fser(i, f))),  # W1
                pl.BlockSpec((1, tf_eff), lambda i, f: (0, _fser(i, f))),  # b1
                pl.BlockSpec((tf_eff, D), lambda i, f: (_fser(i, f), 0)),  # W2
                pl.BlockSpec((1, D), lambda i, f: (0, 0)),              # b2
                pl.BlockSpec((1, D), lambda i, f: (0, 0)),              # gamma
                pl.BlockSpec((1, D), lambda i, f: (0, 0)),              # beta
            ],
            out_specs=pl.BlockSpec((tm_eff, D), lambda i, f: (i, 0)),
            scratch_shapes=[pltpu.VMEM((tm_eff, D), jnp.float32)],
        ),
        compiler_params=pltpu.CompilerParams(
            dimension_semantics=("parallel", "arbitrary"),
            vmem_limit_bytes=vmem_limit_bytes,
        ),
    )(x2, w1, b1r, w2, b2r, gr, br)

    if n_pad != N:
        out = out[:N]
    return out.reshape(S, B, D)


def xavier_uniform(key, fan_in, fan_out, dtype=jnp.float32):
    bound = (6.0 / (fan_in + fan_out)) ** 0.5
    w = jax.random.uniform(key, (fan_in, fan_out), jnp.float32, -bound, bound)
    return w.astype(dtype)


def ffn_reference(x, w1, b1, w2, b2, gamma, beta):
    x = x.astype(jnp.float32)
    h = jnp.maximum(x @ w1.astype(jnp.float32) + b1.astype(jnp.float32), 0.0)
    y = h @ w2.astype(jnp.float32) + b2.astype(jnp.float32)
    r = x + y
    mu = jnp.mean(r, axis=-1, keepdims=True)
    var = jnp.mean((r - mu) ** 2, axis=-1, keepdims=True)
    return ((r - mu) / jnp.sqrt(var + 1e-5) * gamma.astype(jnp.float32)
            + beta.astype(jnp.float32))


if __name__ == "__main__":
    key = jax.random.PRNGKey(0)

    # ---- Test 1: toy shapes consistent with the module (f32, defaults) ------
    S, B, D, F = 8, 2, 32, 64
    kx, k1, k2, key = jax.random.split(key, 4)
    x = jax.random.normal(kx, (S, B, D), jnp.float32)
    w1 = xavier_uniform(k1, D, F)
    b1 = jnp.zeros((F,), jnp.float32)
    w2 = xavier_uniform(k2, F, D)
    b2 = jnp.zeros((D,), jnp.float32)
    gamma = jnp.ones((D,), jnp.float32)
    beta = jnp.zeros((D,), jnp.float32)

    out = jax.block_until_ready(ffn_layer(x, w1, b1, w2, b2, gamma, beta))
    ref = ffn_reference(x, w1, b1, w2, b2, gamma, beta)
    assert out.shape == (S, B, D)
    assert jnp.allclose(out, ref, atol=1e-5, rtol=1e-5), "f32 mismatch vs reference"

    # ---- Test 2: bf16 MXU path, F tiling + F padding + row padding + serpentine
    S2, B2, D2, F2 = 45, 3, 128, 384   # N=135 -> row pad; F=384 -> pad to 512
    kx, k1, k2, key = jax.random.split(key, 4)
    x2 = jax.random.normal(kx, (S2, B2, D2), jnp.float32).astype(jnp.bfloat16)
    w1b = xavier_uniform(k1, D2, F2, jnp.bfloat16)
    b1b = (0.01 * jax.random.normal(key, (F2,), jnp.float32)).astype(jnp.bfloat16)
    w2b = xavier_uniform(k2, F2, D2, jnp.bfloat16)
    b2b = jnp.zeros((D2,), jnp.bfloat16)
    gb = jnp.ones((D2,), jnp.bfloat16)
    bb = jnp.zeros((D2,), jnp.bfloat16)

    out2 = jax.block_until_ready(
        ffn_layer(x2, w1b, b1b, w2b, b2b, gb, bb, tm=64, tf=256))
    ref2 = ffn_reference(x2, w1b, b1b, w2b, b2b, gb, bb)
    assert out2.shape == (S2, B2, D2)
    assert jnp.allclose(out2.astype(jnp.float32), ref2, atol=1e-1, rtol=1e-1), \
        "bf16 mismatch vs reference"

    print("KERNEL_OK")
</pallas_src>

<mosaic_0001>
module attributes {stable_mosaic.version = 11 : i64} {
  func.func @ffn_kernel(%arg0: i32, %arg1: i32, %arg2: memref<16x32xf32, #tpu.memory_space<vmem>>, %arg3: memref<32x256xf32, #tpu.memory_space<vmem>>, %arg4: memref<1x256xf32, #tpu.memory_space<vmem>>, %arg5: memref<256x32xf32, #tpu.memory_space<vmem>>, %arg6: memref<1x32xf32, #tpu.memory_space<vmem>>, %arg7: memref<1x32xf32, #tpu.memory_space<vmem>>, %arg8: memref<1x32xf32, #tpu.memory_space<vmem>>, %arg9: memref<16x32xf32, #tpu.memory_space<vmem>>, %arg10: memref<16x32xf32, #tpu.memory_space<vmem>>) attributes {dimension_semantics = [#tpu.dimension_semantics<parallel>, #tpu.dimension_semantics<arbitrary>], iteration_bounds = array<i64: 1, 1>, scalar_prefetch = 0 : i64, scratch_operands = 1 : i64, tpu.core_type = #tpu.core_type<tc>, window_params = [{transform_indices = @transform_0, window_bounds = array<i64: 16, 32>}, {transform_indices = @transform_1, window_bounds = array<i64: 32, 256>}, {transform_indices = @transform_2, window_bounds = array<i64: 1, 256>}, {transform_indices = @transform_3, window_bounds = array<i64: 256, 32>}, {pipeline_mode = #tpu.pipeline_mode<synchronous>, transform_indices = @transform_4, window_bounds = array<i64: 1, 32>}, {pipeline_mode = #tpu.pipeline_mode<synchronous>, transform_indices = @transform_5, window_bounds = array<i64: 1, 32>}, {pipeline_mode = #tpu.pipeline_mode<synchronous>, transform_indices = @transform_6, window_bounds = array<i64: 1, 32>}, {transform_indices = @transform_7, window_bounds = array<i64: 16, 32>}]} {
    %c0_i32 = arith.constant 0 : i32
    %0 = arith.cmpi eq, %arg1, %c0_i32 : i32
    %1 = arith.extui %0 : i1 to i32
    %c0_i32_0 = arith.constant 0 : i32
    %2 = arith.cmpi ne, %1, %c0_i32_0 : i32
    scf.if %2 {
      %cst_16 = arith.constant 0.000000e+00 : f32
      %19 = vector.broadcast %cst_16 : f32 to vector<16x32xf32>
      %c0_17 = arith.constant 0 : index
      %c0_18 = arith.constant 0 : index
      %20 = vector.load %arg10[%c0_17, %c0_18] : memref<16x32xf32, #tpu.memory_space<vmem>>, vector<16x32xf32>
      tpu.vector_store %arg10[%c0_17, %c0_18], %19 {strides = array<i32>} : memref<16x32xf32, #tpu.memory_space<vmem>>, vector<16x32xf32>,
    } else {
    }
    %c0 = arith.constant 0 : index
    %c0_1 = arith.constant 0 : index
    %3 = vector.load %arg2[%c0, %c0_1] : memref<16x32xf32, #tpu.memory_space<vmem>>, vector<16x32xf32>
    %c0_2 = arith.constant 0 : index
    %c0_3 = arith.constant 0 : index
    %4 = vector.load %arg3[%c0_2, %c0_3] : memref<32x256xf32, #tpu.memory_space<vmem>>, vector<32x256xf32>
    %cst = arith.constant dense<0.000000e+00> : vector<16x256xf32>
    %5 = tpu.matmul %3, %4, %cst {dimension_numbers = #tpu.dot_dimension_numbers<[1], [0], [0], [1], [0, 0, 1, 1], [], []>} : vector<16x32xf32>, vector<32x256xf32>, vector<16x256xf32> -> vector<16x256xf32>
    %c0_4 = arith.constant 0 : index
    %c0_5 = arith.constant 0 : index
    %6 = vector.load %arg4[%c0_4, %c0_5] : memref<1x256xf32, #tpu.memory_space<vmem>>, vector<1x256xf32>
    %7 = vector.broadcast %6 : vector<1x256xf32> to vector<16x256xf32>
    %8 = arith.addf %5, %7 : vector<16x256xf32>
    %cst_6 = arith.constant 0.000000e+00 : f32
    %9 = vector.broadcast %cst_6 : f32 to vector<16x256xf32>
    %10 = arith.maximumf %8, %9 : vector<16x256xf32>
    %c0_7 = arith.constant 0 : index
    %c0_8 = arith.constant 0 : index
    %11 = vector.load %arg10[%c0_7, %c0_8] : memref<16x32xf32, #tpu.memory_space<vmem>>, vector<16x32xf32>
    %c0_9 = arith.constant 0 : index
    %c0_10 = arith.constant 0 : index
    %12 = vector.load %arg5[%c0_9, %c0_10] : memref<256x32xf32, #tpu.memory_space<vmem>>, vector<256x32xf32>
    %cst_11 = arith.constant dense<0.000000e+00> : vector<16x32xf32>
    %13 = tpu.matmul %10, %12, %cst_11 {dimension_numbers = #tpu.dot_dimension_numbers<[1], [0], [0], [1], [0, 0, 1, 1], [], []>} : vector<16x256xf32>, vector<256x32xf32>, vector<16x32xf32> -> vector<16x32xf32>
    %14 = arith.addf %11, %13 : vector<16x32xf32>
    %c0_12 = arith.constant 0 : index
    %c0_13 = arith.constant 0 : index
    %15 = vector.load %arg10[%c0_12, %c0_13] : memref<16x32xf32, #tpu.memory_space<vmem>>, vector<16x32xf32>
    tpu.vector_store %arg10[%c0_12, %c0_13], %14 {strides = array<i32>} : memref<16x32xf32, #tpu.memory_space<vmem>>, vector<16x32xf32>,
    %c0_i32_14 = arith.constant 0 : i32
    %16 = arith.cmpi eq, %arg1, %c0_i32_14 : i32
    %17 = arith.extui %16 : i1 to i32
    %c0_i32_15 = arith.constant 0 : i32
    %18 = arith.cmpi ne, %17, %c0_i32_15 : i32
    scf.if %18 {
      %c0_16 = arith.constant 0 : index
      %c0_17 = arith.constant 0 : index
      %19 = vector.load %arg2[%c0_16, %c0_17] : memref<16x32xf32, #tpu.memory_space<vmem>>, vector<16x32xf32>
      %c0_18 = arith.constant 0 : index
      %c0_19 = arith.constant 0 : index
      %20 = vector.load %arg10[%c0_18, %c0_19] : memref<16x32xf32, #tpu.memory_space<vmem>>, vector<16x32xf32>
      %21 = arith.addf %19, %20 : vector<16x32xf32>
      %c0_20 = arith.constant 0 : index
      %c0_21 = arith.constant 0 : index
      %22 = vector.load %arg6[%c0_20, %c0_21] : memref<1x32xf32, #tpu.memory_space<vmem>>, vector<1x32xf32>
      %23 = vector.broadcast %22 : vector<1x32xf32> to vector<16x32xf32>
      %24 = arith.addf %21, %23 : vector<16x32xf32>
      %cst_22 = arith.constant dense<0.000000e+00> : vector<16xf32>
      %25 = vector.multi_reduction <add>, %24, %cst_22 [1] : vector<16x32xf32> to vector<16xf32>
      %26 = vector.shape_cast %25 : vector<16xf32> to vector<16x1xf32>
      %cst_23 = arith.constant 3.200000e+01 : f32
      %27 = vector.broadcast %cst_23 : f32 to vector<16x1xf32>
      %28 = arith.divf %26, %27 : vector<16x1xf32>
      %29 = vector.broadcast %28 : vector<16x1xf32> to vector<16x32xf32>
      %30 = arith.subf %24, %29 : vector<16x32xf32>
      %31 = vector.broadcast %28 : vector<16x1xf32> to vector<16x32xf32>
      %32 = arith.subf %24, %31 : vector<16x32xf32>
      %33 = arith.mulf %30, %32 : vector<16x32xf32>
      %cst_24 = arith.constant dense<0.000000e+00> : vector<16xf32>
      %34 = vector.multi_reduction <add>, %33, %cst_24 [1] : vector<16x32xf32> to vector<16xf32>
      %35 = vector.shape_cast %34 : vector<16xf32> to vector<16x1xf32>
      %cst_25 = arith.constant 3.200000e+01 : f32
      %36 = vector.broadcast %cst_25 : f32 to vector<16x1xf32>
      %37 = arith.divf %35, %36 : vector<16x1xf32>
      %38 = vector.broadcast %28 : vector<16x1xf32> to vector<16x32xf32>
      %39 = arith.subf %24, %38 : vector<16x32xf32>
      %cst_26 = arith.constant 9.99999974E-6 : f32
      %40 = vector.broadcast %cst_26 : f32 to vector<16x1xf32>
      %41 = arith.addf %37, %40 : vector<16x1xf32>
      %42 = math.rsqrt %41 : vector<16x1xf32>
      %43 = vector.broadcast %42 : vector<16x1xf32> to vector<16x32xf32>
      %44 = arith.mulf %39, %43 : vector<16x32xf32>
      %c0_27 = arith.constant 0 : index
      %c0_28 = arith.constant 0 : index
      %45 = vector.load %arg7[%c0_27, %c0_28] : memref<1x32xf32, #tpu.memory_space<vmem>>, vector<1x32xf32>
      %46 = vector.broadcast %45 : vector<1x32xf32> to vector<16x32xf32>
      %47 = arith.mulf %44, %46 : vector<16x32xf32>
      %c0_29 = arith.constant 0 : index
      %c0_30 = arith.constant 0 : index
      %48 = vector.load %arg8[%c0_29, %c0_30] : memref<1x32xf32, #tpu.memory_space<vmem>>, vector<1x32xf32>
      %49 = vector.broadcast %48 : vector<1x32xf32> to vector<16x32xf32>
      %50 = arith.addf %47, %49 : vector<16x32xf32>
      %c0_31 = arith.constant 0 : index
      %c0_32 = arith.constant 0 : index
      %51 = vector.load %arg9[%c0_31, %c0_32] : memref<16x32xf32, #tpu.memory_space<vmem>>, vector<16x32xf32>
      tpu.vector_store %arg9[%c0_31, %c0_32], %50 {strides = array<i32>} : memref<16x32xf32, #tpu.memory_space<vmem>>, vector<16x32xf32>,
    } else {
    }
    return
  }
  func.func @transform_0(%arg0: i32, %arg1: i32) -> (i32, i32) {
    %c0_i32 = arith.constant 0 : i32
    %c0_i32_0 = arith.constant 0 : i32
    return %arg0, %c0_i32 : i32, i32
  }
  func.func @transform_1(%arg0: i32, %arg1: i32) -> (i32, i32) {
    %c2_i32 = arith.constant 2 : i32
    %c0_i32 = arith.constant 0 : i32
    %0 = arith.cmpi eq, %c2_i32, %c0_i32 : i32
    %c1_i32 = arith.constant 1 : i32
    %1 = arith.select %0, %c1_i32, %c2_i32 : i32
    %2 = arith.remsi %arg0, %1 : i32
    %c0_i32_0 = arith.constant 0 : i32
    %3 = arith.cmpi ne, %2, %c0_i32_0 : i32
    %c0_i32_1 = arith.constant 0 : i32
    %4 = arith.cmpi slt, %2, %c0_i32_1 : i32
    %c0_i32_2 = arith.constant 0 : i32
    %5 = arith.cmpi slt, %1, %c0_i32_2 : i32
    %6 = arith.xori %4, %5 : i1
    %7 = arith.andi %6, %3 : i1
    %8 = arith.addi %2, %1 : i32
    %9 = arith.select %7, %8, %2 : i32
    %c2_i32_3 = arith.constant 2 : i32
    %10 = arith.muli %c2_i32_3, %arg1 : i32
    %c0_i32_4 = arith.constant 0 : i32
    %11 = arith.subi %c0_i32_4, %10 : i32
    %12 = arith.muli %9, %11 : i32
    %13 = arith.addi %arg1, %12 : i32
    %c0_i32_5 = arith.constant 0 : i32
    %c0_i32_6 = arith.constant 0 : i32
    return %c0_i32_5, %13 : i32, i32
  }
  func.func @transform_2(%arg0: i32, %arg1: i32) -> (i32, i32) {
    %c2_i32 = arith.constant 2 : i32
    %c0_i32 = arith.constant 0 : i32
    %0 = arith.cmpi eq, %c2_i32, %c0_i32 : i32
    %c1_i32 = arith.constant 1 : i32
    %1 = arith.select %0, %c1_i32, %c2_i32 : i32
    %2 = arith.remsi %arg0, %1 : i32
    %c0_i32_0 = arith.constant 0 : i32
    %3 = arith.cmpi ne, %2, %c0_i32_0 : i32
    %c0_i32_1 = arith.constant 0 : i32
    %4 = arith.cmpi slt, %2, %c0_i32_1 : i32
    %c0_i32_2 = arith.constant 0 : i32
    %5 = arith.cmpi slt, %1, %c0_i32_2 : i32
    %6 = arith.xori %4, %5 : i1
    %7 = arith.andi %6, %3 : i1
    %8 = arith.addi %2, %1 : i32
    %9 = arith.select %7, %8, %2 : i32
    %c2_i32_3 = arith.constant 2 : i32
    %10 = arith.muli %c2_i32_3, %arg1 : i32
    %c0_i32_4 = arith.constant 0 : i32
    %11 = arith.subi %c0_i32_4, %10 : i32
    %12 = arith.muli %9, %11 : i32
    %13 = arith.addi %arg1, %12 : i32
    %c0_i32_5 = arith.constant 0 : i32
    %c0_i32_6 = arith.constant 0 : i32
    return %c0_i32_5, %13 : i32, i32
  }
  func.func @transform_3(%arg0: i32, %arg1: i32) -> (i32, i32) {
    %c2_i32 = arith.constant 2 : i32
    %c0_i32 = arith.constant 0 : i32
    %0 = arith.cmpi eq, %c2_i32, %c0_i32 : i32
    %c1_i32 = arith.constant 1 : i32
    %1 = arith.select %0, %c1_i32, %c2_i32 : i32
    %2 = arith.remsi %arg0, %1 : i32
    %c0_i32_0 = arith.constant 0 : i32
    %3 = arith.cmpi ne, %2, %c0_i32_0 : i32
    %c0_i32_1 = arith.constant 0 : i32
    %4 = arith.cmpi slt, %2, %c0_i32_1 : i32
    %c0_i32_2 = arith.constant 0 : i32
    %5 = arith.cmpi slt, %1, %c0_i32_2 : i32
    %6 = arith.xori %4, %5 : i1
    %7 = arith.andi %6, %3 : i1
    %8 = arith.addi %2, %1 : i32
    %9 = arith.select %7, %8, %2 : i32
    %c2_i32_3 = arith.constant 2 : i32
    %10 = arith.muli %c2_i32_3, %arg1 : i32
    %c0_i32_4 = arith.constant 0 : i32
    %11 = arith.subi %c0_i32_4, %10 : i32
    %12 = arith.muli %9, %11 : i32
    %13 = arith.addi %arg1, %12 : i32
    %c0_i32_5 = arith.constant 0 : i32
    %c0_i32_6 = arith.constant 0 : i32
    return %13, %c0_i32_5 : i32, i32
  }
  func.func @transform_4(%arg0: i32, %arg1: i32) -> (i32, i32) {
    %c0_i32 = arith.constant 0 : i32
    %c0_i32_0 = arith.constant 0 : i32
    %c0_i32_1 = arith.constant 0 : i32
    return %c0_i32, %c0_i32_0 : i32, i32
  }
  func.func @transform_5(%arg0: i32, %arg1: i32) -> (i32, i32) {
    %c0_i32 = arith.constant 0 : i32
    %c0_i32_0 = arith.constant 0 : i32
    %c0_i32_1 = arith.constant 0 : i32
    return %c0_i32, %c0_i32_0 : i32, i32
  }
  func.func @transform_6(%arg0: i32, %arg1: i32) -> (i32, i32) {
    %c0_i32 = arith.constant 0 : i32
    %c0_i32_0 = arith.constant 0 : i32
    %c0_i32_1 = arith.constant 0 : i32
    return %c0_i32, %c0_i32_0 : i32, i32
  }
  func.func @transform_7(%arg0: i32, %arg1: i32) -> (i32, i32) {
    %c0_i32 = arith.constant 0 : i32
    %c0_i32_0 = arith.constant 0 : i32
    return %arg0, %c0_i32 : i32, i32
  }
}

</mosaic_0001>

<llo_original>
// kernel: tpu_custom_call.1
$region0: #{tpu_custom_call.1}
  #allocation0 [shape = 'u32[]', space=smem, size = 0x4, offset = 0x4, fixed_abs, tag = 'smem constant byte address 0x4 - core index']
  #allocation1 [shape = 'u32[72,128]{1,0:T(1,128)}', space=vmem, size = 0x9000, scoped, tag = 'internal scratch']
  #allocation2 [shape = 'f32[16,32]{1,0:T(8,128)}', space=vmem, size = 0x2000, scoped, tag = 'scratch operand']
  %s0 = inlined_call_operand.vmem [shape: f32[16,32], index: 0, kind: input, shape index: {}]
  %s1 = inlined_call_operand.vmem [shape: f32[32,256], index: 1, kind: input, shape index: {}]
  %s2 = inlined_call_operand.vmem [shape: f32[1,256], index: 2, kind: input, shape index: {}]
  %s3 = inlined_call_operand.vmem [shape: f32[256,32], index: 3, kind: input, shape index: {}]
  %s4 = inlined_call_operand.vmem [shape: f32[1,32], index: 4, kind: input, shape index: {}]
  %s5 = inlined_call_operand.vmem [shape: f32[1,32], index: 5, kind: input, shape index: {}]
  %s6 = inlined_call_operand.vmem [shape: f32[1,32], index: 6, kind: input, shape index: {}]
  %s7 = inlined_call_operand.hbm [shape: f32[16,32], index: 7, kind: output, shape index: {}]
  %s8 = sld [smem:[#allocation0]]
  $region46: #{tpu_custom_call.1} parent=0
    _
  %s10 = ssub.s32 1, %s8
  %s11 = scalar_select 0, %s10, %s8
  $region1: #{tpu_custom_call.1} parent=0
    #allocation3 [shape = 'u8[8192]{0}', space=vmem, size = 0x2000, scoped, tag = 'output window, operand 0, single buffered']
    #allocation4 [shape = 's32[1]{0}', space=sflag, size = 0x4, scoped, tag = 'scoped memory for tpu_custom_call.1']
    %12 = vsyncpa [#allocation4], 0
    // Predicated region
    $region2: #{tpu_custom_call.1} parent=1 // pred_check
      _
    $region3: #{tpu_custom_call.1} parent=1 // pred_check_branch
      %14 = sbr.rel (0) target = $region5
    $region4: #{tpu_custom_call.1} parent=1 // pred_region
      _
    $region5: #{tpu_custom_call.1} parent=1 // pred_fallthru
      _
    // Predicated region
    $region6: #{tpu_custom_call.1} parent=1 // pred_check
      _
    $region7: #{tpu_custom_call.1} parent=1 // pred_check_branch
      %16 = sbr.rel (0) target = $region9
    $region8: #{tpu_custom_call.1} parent=1 // pred_region
      %s17 = ssub.s32 0, 0
      %s18 = ssub.s32 0, 0
      %p19 = scmp.ne.s32.totalorder 0, 0
      %p20 = scmp.lt.s32.totalorder 0, 0
      %p21 = pnand %p20, %p19
      %p22 = pneg %p21
      %s23 = sadd.s32 0, 2
      %s24 = scalar_select %p22, %s23, 0
      %s25 = smul.u32 0, 2
      %s26 = ssub.s32 0, %s25
      %s27 = smul.u32 %s24, %s26
      %s28 = sadd.s32 0, %s27
      %s29 = smul.u32 2, %s28
      %p30 = scmp.lt.s32.totalorder %s29, 1
      %s31 = scalar_select %p30, %s29, 1
      %s32 = smul.addr %s31, 8
      %s33 = scalar_lea.vmem %s1, %s32
      %s34 = ssub.s32 0, 0
      %s35 = ssub.s32 0, 0
      %p36 = scmp.ne.s32.totalorder 0, 0
      %p37 = scmp.lt.s32.totalorder 0, 0
      %p38 = pnand %p37, %p36
      %p39 = pneg %p38
      %s40 = sadd.s32 0, 2
      %s41 = scalar_select %p39, %s40, 0
      %s42 = smul.u32 0, 2
      %s43 = ssub.s32 0, %s42
      %s44 = smul.u32 %s41, %s43
      %s45 = sadd.s32 0, %s44
      %s46 = smul.u32 2, %s45
    $region9: #{tpu_custom_call.1} parent=1 // pred_fallthru
      _
    // Predicated region
    $region10: #{tpu_custom_call.1} parent=1 // pred_check
      _
    $region11: #{tpu_custom_call.1} parent=1 // pred_check_branch
      %48 = sbr.rel (0) target = $region13
    $region12: #{tpu_custom_call.1} parent=1 // pred_region
      %s49 = ssub.s32 0, 0
      %s50 = ssub.s32 0, 0
      %p51 = scmp.ne.s32.totalorder 0, 0
      %p52 = scmp.lt.s32.totalorder 0, 0
      %p53 = pnand %p52, %p51
      %p54 = pneg %p53
      %s55 = sadd.s32 0, 2
      %s56 = scalar_select %p54, %s55, 0
      %s57 = smul.u32 0, 2
      %s58 = ssub.s32 0, %s57
      %s59 = smul.u32 %s56, %s58
      %s60 = sadd.s32 0, %s59
      %s61 = smul.u32 2, %s60
      %p62 = scmp.lt.s32.totalorder %s61, 1
      %s63 = scalar_select %p62, %s61, 1
      %s64 = scalar_lea.vmem %s2, %s63
      %s65 = ssub.s32 0, 0
      %s66 = ssub.s32 0, 0
      %p67 = scmp.ne.s32.totalorder 0, 0
      %p68 = scmp.lt.s32.totalorder 0, 0
      %p69 = pnand %p68, %p67
      %p70 = pneg %p69
      %s71 = sadd.s32 0, 2
      %s72 = scalar_select %p70, %s71, 0
      %s73 = smul.u32 0, 2
      %s74 = ssub.s32 0, %s73
      %s75 = smul.u32 %s72, %s74
      %s76 = sadd.s32 0, %s75
      %s77 = smul.u32 2, %s76
    $region13: #{tpu_custom_call.1} parent=1 // pred_fallthru
      _
    // Predicated region
    $region14: #{tpu_custom_call.1} parent=1 // pred_check
      _
    $region15: #{tpu_custom_call.1} parent=1 // pred_check_branch
      %79 = sbr.rel (0) target = $region17
    $region16: #{tpu_custom_call.1} parent=1 // pred_region
      %s80 = ssub.s32 0, 0
      %s81 = ssub.s32 0, 0
      %p82 = scmp.ne.s32.totalorder 0, 0
      %p83 = scmp.lt.s32.totalorder 0, 0
      %p84 = pnand %p83, %p82
      %p85 = pneg %p84
      %s86 = sadd.s32 0, 2
      %s87 = scalar_select %p85, %s86, 0
      %s88 = smul.u32 0, 2
      %s89 = ssub.s32 0, %s88
      %s90 = smul.u32 %s87, %s89
      %s91 = sadd.s32 0, %s90
      %s92 = smul.u32 32, %s91
      %p93 = scmp.lt.s32.totalorder %s92, 31
      %s94 = scalar_select %p93, %s92, 31
      %s95 = smul.addr %s94, 8
      %s96 = scalar_lea.vmem %s3, %s95
      %s97 = ssub.s32 0, 0
      %s98 = ssub.s32 0, 0
      %p99 = scmp.ne.s32.totalorder 0, 0
      %p100 = scmp.lt.s32.totalorder 0, 0
      %p101 = pnand %p100, %p99
      %p102 = pneg %p101
      %s103 = sadd.s32 0, 2
      %s104 = scalar_select %p102, %s103, 0
      %s105 = smul.u32 0, 2
      %s106 = ssub.s32 0, %s105
      %s107 = smul.u32 %s104, %s106
      %s108 = sadd.s32 0, %s107
      %s109 = smul.u32 32, %s108
    $region17: #{tpu_custom_call.1} parent=1 // pred_fallthru
      _
    // Predicated region
    $region18: #{tpu_custom_call.1} parent=1 // pred_check
      _
    $region19: #{tpu_custom_call.1} parent=1 // pred_check_branch
      %111 = sbr.rel (0) target = $region21
    $region20: #{tpu_custom_call.1} parent=1 // pred_region
      _
    $region21: #{tpu_custom_call.1} parent=1 // pred_fallthru
      _
    // Predicated region
    $region22: #{tpu_custom_call.1} parent=1 // pred_check
      _
    $region23: #{tpu_custom_call.1} parent=1 // pred_check_branch
      %113 = sbr.rel (0) target = $region25
    $region24: #{tpu_custom_call.1} parent=1 // pred_region
      _
    $region25: #{tpu_custom_call.1} parent=1 // pred_fallthru
      _
    // Predicated region
    $region26: #{tpu_custom_call.1} parent=1 // pred_check
      _
    $region27: #{tpu_custom_call.1} parent=1 // pred_check_branch
      %115 = sbr.rel (0) target = $region29
    $region28: #{tpu_custom_call.1} parent=1 // pred_region
      _
    $region29: #{tpu_custom_call.1} parent=1 // pred_fallthru
      _
    %s116 = ssub.s32 0, 0
    %s117 = ssub.s32 0, 0
    %p118 = scmp.ne.s32.totalorder 0, 0
    %p119 = scmp.lt.s32.totalorder 0, 0
    %p120 = pnand %p119, %p118
    %p121 = pneg %p120
    %s122 = sadd.s32 0, 2
    %s123 = scalar_select %p121, %s122, 0
    %s124 = smul.u32 0, 2
    %s125 = ssub.s32 0, %s124
    %s126 = smul.u32 %s123, %s125
    %s127 = sadd.s32 0, %s126
    %s128 = smul.u32 2, %s127
    %p129 = scmp.lt.s32.totalorder %s128, 1
    %s130 = scalar_select %p129, %s128, 1
    %s131 = smul.addr %s130, 8
    %s132 = scalar_lea.vmem %s1, %s131
    %s133 = ssub.s32 0, 0
    %s134 = ssub.s32 0, 0
    %p135 = scmp.ne.s32.totalorder 0, 0
    %p136 = scmp.lt.s32.totalorder 0, 0
    %p137 = pnand %p136, %p135
    %p138 = pneg %p137
    %s139 = sadd.s32 0, 2
    %s140 = scalar_select %p138, %s139, 0
    %s141 = smul.u32 0, 2
    %s142 = ssub.s32 0, %s141
    %s143 = smul.u32 %s140, %s142
    %s144 = sadd.s32 0, %s143
    %s145 = smul.u32 2, %s144
    %p146 = scmp.lt.s32.totalorder %s145, 1
    %s147 = scalar_select %p146, %s145, 1
    %s148 = scalar_lea.vmem %s2, %s147
    %s149 = ssub.s32 0, 0
    %s150 = ssub.s32 0, 0
    %p151 = scmp.ne.s32.totalorder 0, 0
    %p152 = scmp.lt.s32.totalorder 0, 0
    %p153 = pnand %p152, %p151
    %p154 = pneg %p153
    %s155 = sadd.s32 0, 2
    %s156 = scalar_select %p154, %s155, 0
    %s157 = smul.u32 0, 2
    %s158 = ssub.s32 0, %s157
    %s159 = smul.u32 %s156, %s158
    %s160 = sadd.s32 0, %s159
    %s161 = smul.u32 32, %s160
    %p162 = scmp.lt.s32.totalorder %s161, 31
    %s163 = scalar_select %p162, %s161, 31
    %s164 = smul.addr %s163, 8
    %s165 = scalar_lea.vmem %s3, %s164
    %s166 = ssub.s32 0, 0
    %s167 = ssub.s32 0, 0
    %p168 = scmp.ne.s32.totalorder 0, 0
    %p169 = scmp.lt.s32.totalorder 0, 0
    %p170 = pnand %p169, %p168
    %p171 = pneg %p170
    %s172 = sadd.s32 0, 2
    %s173 = scalar_select %p171, %s172, 0
    %s174 = smul.u32 0, 2
    %s175 = ssub.s32 0, %s174
    %s176 = smul.u32 %s173, %s175
    %s177 = sadd.s32 0, %s176
    %s178 = smul.u32 2, %s177
    %p179 = scmp.lt.s32.totalorder %s178, 1
    %s180 = scalar_select %p179, %s178, 1
    %s181 = smul.addr %s180, 8
    %s182 = scalar_lea.vmem %s1, %s181
    %s183 = ssub.s32 0, 0
    %s184 = ssub.s32 0, 0
    %p185 = scmp.ne.s32.totalorder 0, 0
    %p186 = scmp.lt.s32.totalorder 0, 0
    %p187 = pnand %p186, %p185
    %p188 = pneg %p187
    %s189 = sadd.s32 0, 2
    %s190 = scalar_select %p188, %s189, 0
    %s191 = smul.u32 0, 2
    %s192 = ssub.s32 0, %s191
    %s193 = smul.u32 %s190, %s192
    %s194 = sadd.s32 0, %s193
    %s195 = smul.u32 2, %s194
    %s196 = ssub.s32 0, 0
    %s197 = ssub.s32 0, 0
    %p198 = scmp.ne.s32.totalorder 0, 0
    %p199 = scmp.lt.s32.totalorder 0, 0
    %p200 = pnand %p199, %p198
    %p201 = pneg %p200
    %s202 = sadd.s32 0, 2
    %s203 = scalar_select %p201, %s202, 0
    %s204 = smul.u32 0, 2
    %s205 = ssub.s32 0, %s204
    %s206 = smul.u32 %s203, %s205
    %s207 = sadd.s32 0, %s206
    %s208 = smul.u32 2, %s207
    %p209 = scmp.lt.s32.totalorder %s208, 1
    %s210 = scalar_select %p209, %s208, 1
    %s211 = scalar_lea.vmem %s2, %s210
    %s212 = ssub.s32 0, 0
    %s213 = ssub.s32 0, 0
    %p214 = scmp.ne.s32.totalorder 0, 0
    %p215 = scmp.lt.s32.totalorder 0, 0
    %p216 = pnand %p215, %p214
    %p217 = pneg %p216
    %s218 = sadd.s32 0, 2
    %s219 = scalar_select %p217, %s218, 0
    %s220 = smul.u32 0, 2
    %s221 = ssub.s32 0, %s220
    %s222 = smul.u32 %s219, %s221
    %s223 = sadd.s32 0, %s222
    %s224 = smul.u32 2, %s223
    %s225 = ssub.s32 0, 0
    %s226 = ssub.s32 0, 0
    %p227 = scmp.ne.s32.totalorder 0, 0
    %p228 = scmp.lt.s32.totalorder 0, 0
    %p229 = pnand %p228, %p227
    %p230 = pneg %p229
    %s231 = sadd.s32 0, 2
    %s232 = scalar_select %p230, %s231, 0
    %s233 = smul.u32 0, 2
    %s234 = ssub.s32 0, %s233
    %s235 = smul.u32 %s232, %s234
    %s236 = sadd.s32 0, %s235
    %s237 = smul.u32 32, %s236
    %p238 = scmp.lt.s32.totalorder %s237, 31
    %s239 = scalar_select %p238, %s237, 31
    %s240 = smul.addr %s239, 8
    %s241 = scalar_lea.vmem %s3, %s240
    %s242 = ssub.s32 0, 0
    %s243 = ssub.s32 0, 0
    %p244 = scmp.ne.s32.totalorder 0, 0
    %p245 = scmp.lt.s32.totalorder 0, 0
    %p246 = pnand %p245, %p244
    %p247 = pneg %p246
    %s248 = sadd.s32 0, 2
    %s249 = scalar_select %p247, %s248, 0
    %s250 = smul.u32 0, 2
    %s251 = ssub.s32 0, %s250
    %s252 = smul.u32 %s249, %s251
    %s253 = sadd.s32 0, %s252
    %s254 = smul.u32 32, %s253
    %p255 = scmp.eq.s32.totalorder 0, 0
    // Predicated region
    $region30: #{tpu_custom_call.1} parent=1 // pred_check
      %p256 = pneg %p255
    $region31: #{tpu_custom_call.1} parent=1 // pred_check_branch
      %258 = sbr.rel (%p256) target = $region33
    $region32: #{tpu_custom_call.1} parent=1 // pred_region
      %vm259 = vcmask 261120
      %260 = vst.msk [vmem:[#allocation2] sm:$0xff] %vm259, 0.0
      %261 = vst.msk [vmem:[#allocation2 + $0x8] sm:$0xff] %vm259, 0.0
    $region33: #{tpu_custom_call.1} parent=1 // pred_fallthru
      _
    %v262 = vld [vmem:[%s0] sm:$0xff]
    %v263 = vld [vmem:[%s0 + $0x8] sm:$0xff]
    %v264 = vld [vmem:[%s182] sm:$0xff]
    %v265 = vld [vmem:[%s182 + $0x8] sm:$0xff]
    %v266 = vld [vmem:[%s182 + $0x10] sm:$0xff]
    %v267 = vld [vmem:[%s182 + $0x18] sm:$0xff]
    %v268 = vld [vmem:[%s182 + $0x20] sm:$0xff]
    %v269 = vld [vmem:[%s182 + $0x28] sm:$0xff]
    %v270 = vld [vmem:[%s182 + $0x30] sm:$0xff]
    %v271 = vld [vmem:[%s182 + $0x38] sm:$0xff]
    %v272 = vld [vmem:[%s211] sm:$0x3]
    %v274 = vperm.slane %v272, 0
    %v275 = vperm.slane %v272, 1
    %vm278 = vcmask 261120
    %v280 = vsel %vm278, %v262, 0
    %v283 = vsel %vm278, %v263, 0
    %285 = vmatpush.msra.mxu0 0.0
    %286 = vmatpush.msra.mxu0 0.0
    %287 = vmatpush.msra.mxu0 0.0
    %288 = vmatpush.msra.mxu0 0.0
    %289 = vmatpush.msra.mxu0 0.0
    %290 = vmatpush.msra.mxu0 0.0
    %291 = vmatpush.msra.mxu0 0.0
    %292 = vmatpush.msra.mxu0 0.0
    %293 = vmatpush.msra.mxu0 0.0
    %294 = vmatpush.msra.mxu0 0.0
    %295 = vmatpush.msra.mxu0 0.0
    %296 = vmatpush.msra.mxu0 0.0
    %297 = vmatpush.msra.mxu0 %v270
    %298 = vmatpush.msra.mxu0 %v268
    %299 = vmatpush.msra.mxu0 %v266
    %300 = vmatpush.msra.mxu0 %v264
    %301 = vmatmul.f32.gmra.mxu0 %v280
    %v302 = vpop.f32.mrf.mxu0
    %v303 = vadd.f32 %v274, %v302
    %304 = vmatmul.f32.gmra.mxu0 %v283
    %v305 = vpop.f32.mrf.mxu0
    %v306 = vadd.f32 %v274, %v305
    %307 = vdwg.mxu0
    %308 = vmatpush.msra.mxu0 0.0
    %309 = vmatpush.msra.mxu0 0.0
    %310 = vmatpush.msra.mxu0 0.0
    %311 = vmatpush.msra.mxu0 0.0
    %312 = vmatpush.msra.mxu0 0.0
    %313 = vmatpush.msra.mxu0 0.0
    %314 = vmatpush.msra.mxu0 0.0
    %315 = vmatpush.msra.mxu0 0.0
    %316 = vmatpush.msra.mxu0 0.0
    %317 = vmatpush.msra.mxu0 0.0
    %318 = vmatpush.msra.mxu0 0.0
    %319 = vmatpush.msra.mxu0 0.0
    %320 = vmatpush.msra.mxu0 %v271
    %321 = vmatpush.msra.mxu0 %v269
    %322 = vmatpush.msra.mxu0 %v267
    %323 = vmatpush.msra.mxu0 %v265
    %324 = vmatmul.f32.gmra.mxu0 %v280
    %v325 = vpop.f32.mrf.mxu0
    %v326 = vadd.f32 %v275, %v325
    %327 = vmatmul.f32.gmra.mxu0 %v283
    %v328 = vpop.f32.mrf.mxu0
    %v329 = vadd.f32 %v275, %v328
    %330 = vdwg.mxu0
    %v331 = vmax.f32 %v303, 0.0
    %v332 = vmax.f32 %v326, 0.0
    %v333 = vmax.f32 %v306, 0.0
    %v334 = vmax.f32 %v329, 0.0
    %v335 = vld [vmem:[#allocation2] sm:$0xff]
    %v336 = vld [vmem:[#allocation2 + $0x8] sm:$0xff]
    %v337 = vld [vmem:[%s241] sm:$0xff]
    %v338 = vld [vmem:[%s241 + $0x8] sm:$0xff]
    %v339 = vld [vmem:[%s241 + $0x10] sm:$0xff]
    %v340 = vld [vmem:[%s241 + $0x18] sm:$0xff]
    %v341 = vld [vmem:[%s241 + $0x20] sm:$0xff]
    %v342 = vld [vmem:[%s241 + $0x28] sm:$0xff]
    %v343 = vld [vmem:[%s241 + $0x30] sm:$0xff]
    %v344 = vld [vmem:[%s241 + $0x38] sm:$0xff]
    %v345 = vld [vmem:[%s241 + $0x40] sm:$0xff]
    %v346 = vld [vmem:[%s241 + $0x48] sm:$0xff]
    %v347 = vld [vmem:[%s241 + $0x50] sm:$0xff]
    %v348 = vld [vmem:[%s241 + $0x58] sm:$0xff]
    %v349 = vld [vmem:[%s241 + $0x60] sm:$0xff]
    %v350 = vld [vmem:[%s241 + $0x68] sm:$0xff]
    %v351 = vld [vmem:[%s241 + $0x70] sm:$0xff]
    %v352 = vld [vmem:[%s241 + $0x78] sm:$0xff]
    %v353 = vld [vmem:[%s241 + $0x80] sm:$0xff]
    %v354 = vld [vmem:[%s241 + $0x88] sm:$0xff]
    %v355 = vld [vmem:[%s241 + $0x90] sm:$0xff]
    %v356 = vld [vmem:[%s241 + $0x98] sm:$0xff]
    %v357 = vld [vmem:[%s241 + $0xa0] sm:$0xff]
    %v358 = vld [vmem:[%s241 + $0xa8] sm:$0xff]
    %v359 = vld [vmem:[%s241 + $0xb0] sm:$0xff]
    %v360 = vld [vmem:[%s241 + $0xb8] sm:$0xff]
    %v361 = vld [vmem:[%s241 + $0xc0] sm:$0xff]
    %v362 = vld [vmem:[%s241 + $0xc8] sm:$0xff]
    %v363 = vld [vmem:[%s241 + $0xd0] sm:$0xff]
    %v364 = vld [vmem:[%s241 + $0xd8] sm:$0xff]
    %v365 = vld [vmem:[%s241 + $0xe0] sm:$0xff]
    %v366 = vld [vmem:[%s241 + $0xe8] sm:$0xff]
    %v367 = vld [vmem:[%s241 + $0xf0] sm:$0xff]
    %v368 = vld [vmem:[%s241 + $0xf8] sm:$0xff]
    %369 = vmatpush.msra.mxu0 %v352
    %370 = vmatpush.msra.mxu0 %v351
    %371 = vmatpush.msra.mxu0 %v350
    %372 = vmatpush.msra.mxu0 %v349
    %373 = vmatpush.msra.mxu0 %v348
    %374 = vmatpush.msra.mxu0 %v347
    %375 = vmatpush.msra.mxu0 %v346
    %376 = vmatpush.msra.mxu0 %v345
    %377 = vmatpush.msra.mxu0 %v344
    %378 = vmatpush.msra.mxu0 %v343
    %379 = vmatpush.msra.mxu0 %v342
    %380 = vmatpush.msra.mxu0 %v341
    %381 = vmatpush.msra.mxu0 %v340
    %382 = vmatpush.msra.mxu0 %v339
    %383 = vmatpush.msra.mxu0 %v338
    %384 = vmatpush.msra.mxu0 %v337
    %385 = vmatmul.f32.gmra.mxu0 %v331
    %v386 = vpop.f32.mrf.mxu0
    %v387 = vadd.f32 0.0, %v386
    %388 = vmatmul.f32.gmra.mxu0 %v333
    %v389 = vpop.f32.mrf.mxu0
    %v390 = vadd.f32 0.0, %v389
    %391 = vdwg.mxu0
    %392 = vmatpush.msra.mxu0 %v368
    %393 = vmatpush.msra.mxu0 %v367
    %394 = vmatpush.msra.mxu0 %v366
    %395 = vmatpush.msra.mxu0 %v365
    %396 = vmatpush.msra.mxu0 %v364
    %397 = vmatpush.msra.mxu0 %v363
    %398 = vmatpush.msra.mxu0 %v362
    %399 = vmatpush.msra.mxu0 %v361
    %400 = vmatpush.msra.mxu0 %v360
    %401 = vmatpush.msra.mxu0 %v359
    %402 = vmatpush.msra.mxu0 %v358
    %403 = vmatpush.msra.mxu0 %v357
    %404 = vmatpush.msra.mxu0 %v356
    %405 = vmatpush.msra.mxu0 %v355
    %406 = vmatpush.msra.mxu0 %v354
    %407 = vmatpush.msra.mxu0 %v353
    %408 = vmatmul.f32.gmra.mxu0 %v332
    %v409 = vpop.f32.mrf.mxu0
    %v410 = vadd.f32 %v387, %v409
    %411 = vmatmul.f32.gmra.mxu0 %v334
    %v412 = vpop.f32.mrf.mxu0
    %v413 = vadd.f32 %v390, %v412
    %414 = vdwg.mxu0
    %v415 = vadd.f32 %v335, %v410
    %v416 = vadd.f32 %v336, %v413
    %417 = vst.msk [vmem:[#allocation2] sm:$0xff] %vm278, %v415
    %418 = vst.msk [vmem:[#allocation2 + $0x8] sm:$0xff] %vm278, %v416
    // Predicated region
    $region34: #{tpu_custom_call.1} parent=1 // pred_check
      %p419 = pneg %p255
    $region35: #{tpu_custom_call.1} parent=1 // pred_check_branch
      %421 = sbr.rel (%p419) target = $region37
    $region36: #{tpu_custom_call.1} parent=1 // pred_region
      %v422 = vld [vmem:[%s0] sm:$0xff]
      %v423 = vld [vmem:[%s0 + $0x8] sm:$0xff]
      %v424 = vld [vmem:[#allocation2] sm:$0xff]
      %v425 = vld [vmem:[#allocation2 + $0x8] sm:$0xff]
      %v426 = vadd.f32 %v422, %v424
      %v427 = vadd.f32 %v423, %v425
      %v428 = vld [vmem:[%s4] sm:$0x1]
      %v430 = vperm.slane %v428, 0
      %v432 = vadd.f32 %v426, %v430
      %v433 = vadd.f32 %v427, %v430
      %v434 = vsel %vm278, %v432, 0.0
      %435 = vadd.xlane.f32.xlu0 %v434
      %v436 = vpop.xlane.xlu0 %435
      %v437 = vsel %vm278, %v433, 0.0
      %438 = vadd.xlane.f32.xlu0 %v437
      %v439 = vpop.xlane.xlu0 %438
      %v440 = vrcp.pop 32.0
      %v441 = vmul.f32 32.0, %v440
      %v442 = vsub.f32 1.0, %v441
      %v443 = vmul.f32 %v440, %v442
      %v444 = vadd.f32 %v440, %v443
      %vm445 = vweird.f32 %v440
      %v446 = vsel %vm445, %v440, %v444
      %v447 = vmul.f32 %v436, %v446
      %v448 = vmul.f32 %v439, %v446
      %v449 = vsub.f32 %v432, %v447
      %v450 = vsub.f32 %v433, %v448
      %v451 = vmul.f32 %v449, %v449
      %v452 = vmul.f32 %v450, %v450
      %v453 = vsel %vm278, %v451, 0.0
      %454 = vadd.xlane.f32.xlu0 %v453
      %v455 = vpop.xlane.xlu0 %454
      %v456 = vsel %vm278, %v452, 0.0
      %457 = vadd.xlane.f32.xlu0 %v456
      %v458 = vpop.xlane.xlu0 %457
      %v459 = vmul.f32 %v455, %v446
      %v460 = vmul.f32 %v458, %v446
      %v461 = vadd.f32 %v459, 1e-05
      %v462 = vadd.f32 %v460, 1e-05
      %v463 = vrsqrt.pop %v461
      %v464 = vmul.f32 %v463, %v461
      %v465 = vmul.f32 %v464, %v463
      %v466 = vmul.f32 0.5, %v465
      %v467 = vsub.f32 1.5, %v466
      %v468 = vmul.f32 %v463, %v467
      %vm469 = vweird.f32 %v461
      %vm470 = vweird.f32 %v463
      %vm471 = vmor %vm469, %vm470
      %v472 = vsel %vm471, %v463, %v468
      %v473 = vrsqrt.pop %v462
      %v474 = vmul.f32 %v473, %v462
      %v475 = vmul.f32 %v474, %v473
      %v476 = vmul.f32 0.5, %v475
      %v477 = vsub.f32 1.5, %v476
      %v478 = vmul.f32 %v473, %v477
      %vm479 = vweird.f32 %v462
      %vm480 = vweird.f32 %v473
      %vm481 = vmor %vm479, %vm480
      %v482 = vsel %vm481, %v473, %v478
      %v483 = vmul.f32 %v449, %v472
      %v484 = vmul.f32 %v450, %v482
      %v485 = vld [vmem:[%s5] sm:$0x1]
      %v487 = vperm.slane %v485, 0
      %v489 = vmul.f32 %v483, %v487
      %v490 = vmul.f32 %v484, %v487
      %v491 = vld [vmem:[%s6] sm:$0x1]
      %v493 = vperm.slane %v491, 0
      %v495 = vadd.f32 %v489, %v493
      %v496 = vadd.f32 %v490, %v493
      %497 = vst.msk [vmem:[#allocation3] sm:$0xff] %vm278, %v495
      %498 = vst.msk [vmem:[#allocation3 + $0x8] sm:$0xff] %vm278, %v496
    $region37: #{tpu_custom_call.1} parent=1 // pred_fallthru
      _
    // Predicated region
    $region38: #{tpu_custom_call.1} parent=1 // pred_check
      _
    $region39: #{tpu_custom_call.1} parent=1 // pred_check_branch
      %500 = sbr.rel (0) target = $region41
    $region40: #{tpu_custom_call.1} parent=1 // pred_region
      %502 = vsyncadd [#allocation4], 0
      %s503 = sshll.u32 [#allocation3], 4
      %s504 = int_to_ptr.vmem [resolvable:$true] %s503
      %s505 = sshll.u32 %s7, 4
      %s506 = int_to_ptr.hbm [resolvable:$true] %s505
      %511 = dma.vmem_to_hbm [thread:$0]  %s504, 256, %s506, [#allocation4], 128, 128, 8
    $region41: #{tpu_custom_call.1} parent=1 // pred_fallthru
      _
    // Predicated region
    $region42: #{tpu_custom_call.1} parent=1 // pred_check
      _
    $region43: #{tpu_custom_call.1} parent=1 // pred_check_branch
      %513 = sbr.rel (0) target = $region45
    $region44: #{tpu_custom_call.1} parent=1 // pred_region
      %515 = dma.done [#allocation4], 256
    $region45: #{tpu_custom_call.1} parent=1 // pred_fallthru
      _
    %516 = vsyncpa [#allocation4], 1

</llo_original>
